<compile_context>
chip_gen: v6e
topology: v6e:2x2x1
jax: 0.10.0
libtpu: 0.0.40
codegen_flags: <defaults>
</compile_context>

<pallas_src>
import math

import jax
import jax.numpy as jnp
from jax.experimental import pallas as pl
from jax.experimental.pallas import tpu as pltpu


# ----------------------------------------------------------------------------
# Pallas kernel: one grid step processes TB batch elements entirely in VMEM.
# ----------------------------------------------------------------------------
def relnn_kernel(x_ref, wu_ref, bu_ref, wu1_ref, bu1_ref, we_ref, beh_ref,
                 out_ref, yflat_ref):
    tb, n, f = x_ref.shape
    hd = wu_ref.shape[1]
    mdt = wu_ref.dtype                       # matmul operand dtype (f32/bf16)

    # --- node MLP: fc_u -> relu -> fc_u1 -> relu (f32 accumulation) ---------
    x = x_ref[...].reshape(tb * n, f)                                # (TB*N,F)
    h1 = jnp.dot(x, wu_ref[...], preferred_element_type=jnp.float32)
    h1 = jnp.maximum(h1 + bu_ref[...], 0.0)                          # (TB*N,H)
    h2 = jnp.dot(h1.astype(mdt), wu1_ref[...],
                 preferred_element_type=jnp.float32)
    h2 = jnp.maximum(h2 + bu1_ref[...], 0.0)                         # (TB*N,H)

    # --- edge matmul distributed over the pairwise sum ----------------------
    #   (h2_i + h2_j)@We + be == (h2_i@We + be/2) + (h2_j@We + be/2)
    y = jnp.dot(h2.astype(mdt), we_ref[...],
                preferred_element_type=jnp.float32)
    y = (y + beh_ref[...]).reshape(tb, n, hd)                        # (TB,N,H)

    # --- fold to a lane-dense (TB, N*H) slab via VMEM scratch ---------------
    for i in range(n):
        yflat_ref[:, i * hd:(i + 1) * hd] = y[:, i, :]
    yf = yflat_ref[...]                                              # (TB,N*H)

    # --- symmetric pairwise tanh via cyclic lane rolls ----------------------
    # sum_{i,j} tanh(y_i + y_j) = T_0 + 2*sum_{d=1}^{ceil(N/2)-1} T_d
    #                                 + (N even ? T_{N/2} : 0),
    # where T_d = sum_i tanh(y_i + y_{(i+d) mod N}) and T_d == T_{N-d}.
    # Each T_d is one full-lane roll + add + tanh on the (TB, N*H) slab.
    acc = jnp.tanh(2.0 * yf)                                         # d = 0
    for d in range(1, (n + 1) // 2):
        acc = acc + 2.0 * jnp.tanh(yf + pltpu.roll(yf, d * hd, axis=1))
    if n % 2 == 0 and n > 1:
        acc = acc + jnp.tanh(yf + pltpu.roll(yf, (n // 2) * hd, axis=1))

    # --- reduce the N lane-blocks and take the mean over N*N pairs ----------
    total = acc[:, 0:hd]
    for i in range(1, n):
        total = total + acc[:, i * hd:(i + 1) * hd]
    out_ref[...] = total * (1.0 / float(n * n))                      # (TB, H)


# ----------------------------------------------------------------------------
# Generation-aware planning helpers.
# ----------------------------------------------------------------------------
def _vmem_budget_bytes():
    try:
        cap = pltpu.get_tpu_info().vmem_capacity_bytes
    except Exception:
        cap = 64 * 1024 * 1024
    return int(cap * 3 // 4)          # leave headroom below physical VMEM


def _num_tensorcores():
    try:
        kind = jax.devices()[0].device_kind.lower()
    except Exception:
        kind = ""
    return 2 if "v7" in kind else 1   # v7x: 2 TCs/chip; v5e/v6e: 1


def _pick_tb(batch, n, f, h, matmul_itemsize, vmem_budget, n_cores):
    """Largest TB dividing `batch` whose per-step footprint fits VMEM, with
    the grid a multiple of the TensorCore count; prefer sublane-aligned TB."""
    def footprint(tb):
        jets = 2 * tb * n * f * matmul_itemsize             # double-buffered
        wts = 2 * (f * h + 2 * h * h) * matmul_itemsize + 2 * 3 * h * 4
        outp = 2 * tb * h * 4
        scratch = tb * n * h * 4                             # lane-flat y
        live = 8 * tb * n * h * 4 + 2 * tb * n * f * 4       # kernel temps
        return jets + wts + outp + scratch + live

    divs = sorted((t for t in range(1, batch + 1) if batch % t == 0),
                  reverse=True)
    feasible = [t for t in divs if footprint(t) <= vmem_budget] or [divs[-1]]
    core_ok = [t for t in feasible if (batch // t) % n_cores == 0] or feasible
    aligned = [t for t in core_ok if t % 8 == 0] or core_ok
    return aligned[0]


# ----------------------------------------------------------------------------
# Wrapper.
# ----------------------------------------------------------------------------
def relnn_forward(jets_padded, wu, bu, wu1, bu1, we, be, *, tb=None,
                  matmul_dtype=jnp.float32):
    B, N, F = jets_padded.shape
    H = wu.shape[1]
    itemsize = jnp.dtype(matmul_dtype).itemsize
    vmem_budget = _vmem_budget_bytes()
    n_cores = _num_tensorcores()
    if tb is None:
        tb = _pick_tb(B, N, F, H, itemsize, vmem_budget, n_cores)
    assert B % tb == 0, (B, tb)
    grid = (B // tb,)

    # Matmul operands optionally in bf16 (f32 accumulation); VPU/EUP math f32.
    jets_c = jets_padded.astype(matmul_dtype)
    wu_c = wu.astype(matmul_dtype)
    wu1_c = wu1.astype(matmul_dtype)
    we_c = we.astype(matmul_dtype)
    bu_f = bu.astype(jnp.float32)
    bu1_f = bu1.astype(jnp.float32)
    be_half = (0.5 * be).astype(jnp.float32)   # distributed-bias precompute

    # Advisory cost hint (symmetric tanh stage: ~(N//2+1) rolls per item).
    n_shifts = N // 2 + 1
    flops = int(B * N * (2 * F * H + 4 * H * H)
                + 3 * B * n_shifts * N * H + B * N * H)
    transcendentals = int(B * n_shifts * N * H)
    bytes_accessed = int(jets_c.size * itemsize
                         + (wu_c.size + wu1_c.size + we_c.size) * itemsize
                         + (bu_f.size + bu1_f.size + be_half.size + B * H) * 4)

    out = pl.pallas_call(
        relnn_kernel,
        out_shape=jax.ShapeDtypeStruct((B, H), jnp.float32),
        grid_spec=pltpu.PrefetchScalarGridSpec(
            num_scalar_prefetch=0,
            grid=grid,
            in_specs=[
                pl.BlockSpec((tb, N, F), lambda b: (b, 0, 0)),  # jets_padded
                pl.BlockSpec((F, H), lambda b: (0, 0)),         # Wu  (in,out)
                pl.BlockSpec((1, H), lambda b: (0, 0)),         # bu
                pl.BlockSpec((H, H), lambda b: (0, 0)),         # Wu1 (in,out)
                pl.BlockSpec((1, H), lambda b: (0, 0)),         # bu1
                pl.BlockSpec((H, H), lambda b: (0, 0)),         # We  (in,out)
                pl.BlockSpec((1, H), lambda b: (0, 0)),         # be / 2
            ],
            out_specs=pl.BlockSpec((tb, H), lambda b: (b, 0)),
            scratch_shapes=[pltpu.VMEM((tb, N * H), jnp.float32)],
        ),
        compiler_params=pltpu.CompilerParams(
            dimension_semantics=("parallel",),
            vmem_limit_bytes=vmem_budget),
        cost_estimate=pl.CostEstimate(
            flops=flops, transcendentals=transcendentals,
            bytes_accessed=bytes_accessed),
    )(jets_c, wu_c, bu_f, wu1_c, bu1_f, we_c, be_half)
    return out                                               # (B, H)


# ----------------------------------------------------------------------------
# Deterministic parameter init mirroring the PyTorch __init__:
#   fc_u.weight   : xavier_uniform, gain = calculate_gain('relu') = sqrt(2)
#   fc_u1.weight  : orthogonal,     gain = sqrt(2)
#   fc_edge.weight: orthogonal,     gain = sqrt(2)
#   biases        : nn.Linear default uniform(-1/sqrt(fan_in), 1/sqrt(fan_in))
# Weights are built as (out, in) like PyTorch, then transposed to (in, out).
# ----------------------------------------------------------------------------
def xavier_uniform(key, out_dim, in_dim, gain):
    bound = gain * math.sqrt(6.0 / (in_dim + out_dim))
    return jax.random.uniform(key, (out_dim, in_dim), jnp.float32,
                              minval=-bound, maxval=bound)


def orthogonal(key, out_dim, in_dim, gain):
    a = jax.random.normal(key, (out_dim, in_dim), jnp.float32)
    q, r = jnp.linalg.qr(a)
    q = q * jnp.sign(jnp.diag(r))[None, :]
    return gain * q


def linear_bias(key, in_dim, out_dim):
    bound = 1.0 / math.sqrt(in_dim)
    return jax.random.uniform(key, (1, out_dim), jnp.float32,
                              minval=-bound, maxval=bound)


def make_params(n_features, n_hidden, key):
    gain = math.sqrt(2.0)  # calculate_gain('relu')
    k = jax.random.split(key, 6)
    wu = xavier_uniform(k[0], n_hidden, n_features, gain).T      # (F, H)
    bu = linear_bias(k[1], n_features, n_hidden)                 # (1, H)
    wu1 = orthogonal(k[2], n_hidden, n_hidden, gain).T           # (H, H)
    bu1 = linear_bias(k[3], n_hidden, n_hidden)                  # (1, H)
    we = orthogonal(k[4], n_hidden, n_hidden, gain).T            # (H, H)
    be = linear_bias(k[5], n_hidden, n_hidden)                   # (1, H)
    return wu, bu, wu1, bu1, we, be


def reference_forward(jets_padded, wu, bu, wu1, bu1, we, be):
    x = jax.nn.relu(jnp.einsum("bnf,fh->bnh", jets_padded, wu) + bu[0])
    x = jax.nn.relu(jnp.einsum("bnh,hk->bnk", x, wu1) + bu1[0])
    s = x[:, :, None, :] + x[:, None, :, :]
    h = jnp.tanh(jnp.einsum("bijh,hk->bijk", s, we) + be[0])
    B, N, _, H = h.shape
    return h.reshape(B, N * N, H).mean(axis=1)


if __name__ == "__main__":
    # batch, padded jet size, n_features, n_hidden
    B, N, F, H = 16, 8, 32, 32

    key = jax.random.PRNGKey(0)
    k_data, k_params = jax.random.split(key)

    jets_padded = jax.random.normal(k_data, (B, N, F), jnp.float32)
    params = make_params(F, H, k_params)

    ref = reference_forward(jets_padded, *params)

    # f32 matmul operands: exact same math as the reference (modulo sum order)
    out = jax.block_until_ready(relnn_forward(jets_padded, *params))
    assert out.shape == (B, H)
    assert jnp.allclose(out, ref, atol=1e-2, rtol=1e-2)

    # bf16 MXU operands (f32 accumulation, f32 relu/tanh) - looser tolerance
    out_bf16 = jax.block_until_ready(
        relnn_forward(jets_padded, *params, matmul_dtype=jnp.bfloat16))
    assert out_bf16.shape == (B, H)
    assert jnp.allclose(out_bf16, ref, atol=5e-2, rtol=5e-2)

    print("KERNEL_OK")
</pallas_src>

<mosaic_0001>
module attributes {stable_mosaic.version = 11 : i64} {
  func.func @relnn_kernel(%arg0: i32, %arg1: memref<16x8x32xf32, #tpu.memory_space<vmem>>, %arg2: memref<32x32xf32, #tpu.memory_space<vmem>>, %arg3: memref<1x32xf32, #tpu.memory_space<vmem>>, %arg4: memref<32x32xf32, #tpu.memory_space<vmem>>, %arg5: memref<1x32xf32, #tpu.memory_space<vmem>>, %arg6: memref<32x32xf32, #tpu.memory_space<vmem>>, %arg7: memref<1x32xf32, #tpu.memory_space<vmem>>, %arg8: memref<16x32xf32, #tpu.memory_space<vmem>>, %arg9: memref<16x256xf32, #tpu.memory_space<vmem>>) attributes {dimension_semantics = [#tpu.dimension_semantics<parallel>], iteration_bounds = array<i64: 1>, scalar_prefetch = 0 : i64, scratch_operands = 1 : i64, tpu.core_type = #tpu.core_type<tc>, window_params = [{transform_indices = @transform_0, window_bounds = array<i64: 16, 8, 32>}, {pipeline_mode = #tpu.pipeline_mode<synchronous>, transform_indices = @transform_1, window_bounds = array<i64: 32, 32>}, {pipeline_mode = #tpu.pipeline_mode<synchronous>, transform_indices = @transform_2, window_bounds = array<i64: 1, 32>}, {pipeline_mode = #tpu.pipeline_mode<synchronous>, transform_indices = @transform_3, window_bounds = array<i64: 32, 32>}, {pipeline_mode = #tpu.pipeline_mode<synchronous>, transform_indices = @transform_4, window_bounds = array<i64: 1, 32>}, {pipeline_mode = #tpu.pipeline_mode<synchronous>, transform_indices = @transform_5, window_bounds = array<i64: 32, 32>}, {pipeline_mode = #tpu.pipeline_mode<synchronous>, transform_indices = @transform_6, window_bounds = array<i64: 1, 32>}, {transform_indices = @transform_7, window_bounds = array<i64: 16, 32>}]} {
    %c0 = arith.constant 0 : index
    %c0_0 = arith.constant 0 : index
    %c0_1 = arith.constant 0 : index
    %0 = vector.load %arg1[%c0, %c0_0, %c0_1] : memref<16x8x32xf32, #tpu.memory_space<vmem>>, vector<16x8x32xf32>
    %1 = vector.shape_cast %0 : vector<16x8x32xf32> to vector<128x32xf32>
    %c0_2 = arith.constant 0 : index
    %c0_3 = arith.constant 0 : index
    %2 = vector.load %arg2[%c0_2, %c0_3] : memref<32x32xf32, #tpu.memory_space<vmem>>, vector<32x32xf32>
    %cst = arith.constant dense<0.000000e+00> : vector<128x32xf32>
    %3 = tpu.matmul %1, %2, %cst {dimension_numbers = #tpu.dot_dimension_numbers<[1], [0], [0], [1], [0, 0, 1, 1], [], []>} : vector<128x32xf32>, vector<32x32xf32>, vector<128x32xf32> -> vector<128x32xf32>
    %c0_4 = arith.constant 0 : index
    %c0_5 = arith.constant 0 : index
    %4 = vector.load %arg3[%c0_4, %c0_5] : memref<1x32xf32, #tpu.memory_space<vmem>>, vector<1x32xf32>
    %5 = vector.broadcast %4 : vector<1x32xf32> to vector<128x32xf32>
    %6 = arith.addf %3, %5 : vector<128x32xf32>
    %cst_6 = arith.constant 0.000000e+00 : f32
    %7 = vector.broadcast %cst_6 : f32 to vector<128x32xf32>
    %8 = arith.maximumf %6, %7 : vector<128x32xf32>
    %c0_7 = arith.constant 0 : index
    %c0_8 = arith.constant 0 : index
    %9 = vector.load %arg4[%c0_7, %c0_8] : memref<32x32xf32, #tpu.memory_space<vmem>>, vector<32x32xf32>
    %cst_9 = arith.constant dense<0.000000e+00> : vector<128x32xf32>
    %10 = tpu.matmul %8, %9, %cst_9 {dimension_numbers = #tpu.dot_dimension_numbers<[1], [0], [0], [1], [0, 0, 1, 1], [], []>} : vector<128x32xf32>, vector<32x32xf32>, vector<128x32xf32> -> vector<128x32xf32>
    %c0_10 = arith.constant 0 : index
    %c0_11 = arith.constant 0 : index
    %11 = vector.load %arg5[%c0_10, %c0_11] : memref<1x32xf32, #tpu.memory_space<vmem>>, vector<1x32xf32>
    %12 = vector.broadcast %11 : vector<1x32xf32> to vector<128x32xf32>
    %13 = arith.addf %10, %12 : vector<128x32xf32>
    %cst_12 = arith.constant 0.000000e+00 : f32
    %14 = vector.broadcast %cst_12 : f32 to vector<128x32xf32>
    %15 = arith.maximumf %13, %14 : vector<128x32xf32>
    %c0_13 = arith.constant 0 : index
    %c0_14 = arith.constant 0 : index
    %16 = vector.load %arg6[%c0_13, %c0_14] : memref<32x32xf32, #tpu.memory_space<vmem>>, vector<32x32xf32>
    %cst_15 = arith.constant dense<0.000000e+00> : vector<128x32xf32>
    %17 = tpu.matmul %15, %16, %cst_15 {dimension_numbers = #tpu.dot_dimension_numbers<[1], [0], [0], [1], [0, 0, 1, 1], [], []>} : vector<128x32xf32>, vector<32x32xf32>, vector<128x32xf32> -> vector<128x32xf32>
    %c0_16 = arith.constant 0 : index
    %c0_17 = arith.constant 0 : index
    %18 = vector.load %arg7[%c0_16, %c0_17] : memref<1x32xf32, #tpu.memory_space<vmem>>, vector<1x32xf32>
    %19 = vector.broadcast %18 : vector<1x32xf32> to vector<128x32xf32>
    %20 = arith.addf %17, %19 : vector<128x32xf32>
    %21 = vector.shape_cast %20 : vector<128x32xf32> to vector<16x8x32xf32>
    %22 = vector.extract_strided_slice %21 {offsets = [0, 0, 0], sizes = [16, 1, 32], strides = [1, 1, 1]} : vector<16x8x32xf32> to vector<16x1x32xf32>
    %23 = vector.shape_cast %22 : vector<16x1x32xf32> to vector<16x32xf32>
    %c0_18 = arith.constant 0 : index
    %c0_19 = arith.constant 0 : index
    %24 = vector.load %arg9[%c0_18, %c0_19] : memref<16x256xf32, #tpu.memory_space<vmem>>, vector<16x32xf32>
    tpu.vector_store %arg9[%c0_18, %c0_19], %23 {strides = array<i32>} : memref<16x256xf32, #tpu.memory_space<vmem>>, vector<16x32xf32>,
    %25 = vector.extract_strided_slice %21 {offsets = [0, 1, 0], sizes = [16, 1, 32], strides = [1, 1, 1]} : vector<16x8x32xf32> to vector<16x1x32xf32>
    %26 = vector.shape_cast %25 : vector<16x1x32xf32> to vector<16x32xf32>
    %c0_20 = arith.constant 0 : index
    %c32 = arith.constant 32 : index
    %27 = vector.load %arg9[%c0_20, %c32] : memref<16x256xf32, #tpu.memory_space<vmem>>, vector<16x32xf32>
    tpu.vector_store %arg9[%c0_20, %c32], %26 {strides = array<i32>} : memref<16x256xf32, #tpu.memory_space<vmem>>, vector<16x32xf32>,
    %28 = vector.extract_strided_slice %21 {offsets = [0, 2, 0], sizes = [16, 1, 32], strides = [1, 1, 1]} : vector<16x8x32xf32> to vector<16x1x32xf32>
    %29 = vector.shape_cast %28 : vector<16x1x32xf32> to vector<16x32xf32>
    %c0_21 = arith.constant 0 : index
    %c64 = arith.constant 64 : index
    %30 = vector.load %arg9[%c0_21, %c64] : memref<16x256xf32, #tpu.memory_space<vmem>>, vector<16x32xf32>
    tpu.vector_store %arg9[%c0_21, %c64], %29 {strides = array<i32>} : memref<16x256xf32, #tpu.memory_space<vmem>>, vector<16x32xf32>,
    %31 = vector.extract_strided_slice %21 {offsets = [0, 3, 0], sizes = [16, 1, 32], strides = [1, 1, 1]} : vector<16x8x32xf32> to vector<16x1x32xf32>
    %32 = vector.shape_cast %31 : vector<16x1x32xf32> to vector<16x32xf32>
    %c0_22 = arith.constant 0 : index
    %c96 = arith.constant 96 : index
    %33 = vector.load %arg9[%c0_22, %c96] : memref<16x256xf32, #tpu.memory_space<vmem>>, vector<16x32xf32>
    tpu.vector_store %arg9[%c0_22, %c96], %32 {strides = array<i32>} : memref<16x256xf32, #tpu.memory_space<vmem>>, vector<16x32xf32>,
    %34 = vector.extract_strided_slice %21 {offsets = [0, 4, 0], sizes = [16, 1, 32], strides = [1, 1, 1]} : vector<16x8x32xf32> to vector<16x1x32xf32>
    %35 = vector.shape_cast %34 : vector<16x1x32xf32> to vector<16x32xf32>
    %c0_23 = arith.constant 0 : index
    %c128 = arith.constant 128 : index
    %36 = vector.load %arg9[%c0_23, %c128] : memref<16x256xf32, #tpu.memory_space<vmem>>, vector<16x32xf32>
    tpu.vector_store %arg9[%c0_23, %c128], %35 {strides = array<i32>} : memref<16x256xf32, #tpu.memory_space<vmem>>, vector<16x32xf32>,
    %37 = vector.extract_strided_slice %21 {offsets = [0, 5, 0], sizes = [16, 1, 32], strides = [1, 1, 1]} : vector<16x8x32xf32> to vector<16x1x32xf32>
    %38 = vector.shape_cast %37 : vector<16x1x32xf32> to vector<16x32xf32>
    %c0_24 = arith.constant 0 : index
    %c160 = arith.constant 160 : index
    %39 = vector.load %arg9[%c0_24, %c160] : memref<16x256xf32, #tpu.memory_space<vmem>>, vector<16x32xf32>
    tpu.vector_store %arg9[%c0_24, %c160], %38 {strides = array<i32>} : memref<16x256xf32, #tpu.memory_space<vmem>>, vector<16x32xf32>,
    %40 = vector.extract_strided_slice %21 {offsets = [0, 6, 0], sizes = [16, 1, 32], strides = [1, 1, 1]} : vector<16x8x32xf32> to vector<16x1x32xf32>
    %41 = vector.shape_cast %40 : vector<16x1x32xf32> to vector<16x32xf32>
    %c0_25 = arith.constant 0 : index
    %c192 = arith.constant 192 : index
    %42 = vector.load %arg9[%c0_25, %c192] : memref<16x256xf32, #tpu.memory_space<vmem>>, vector<16x32xf32>
    tpu.vector_store %arg9[%c0_25, %c192], %41 {strides = array<i32>} : memref<16x256xf32, #tpu.memory_space<vmem>>, vector<16x32xf32>,
    %43 = vector.extract_strided_slice %21 {offsets = [0, 7, 0], sizes = [16, 1, 32], strides = [1, 1, 1]} : vector<16x8x32xf32> to vector<16x1x32xf32>
    %44 = vector.shape_cast %43 : vector<16x1x32xf32> to vector<16x32xf32>
    %c0_26 = arith.constant 0 : index
    %c224 = arith.constant 224 : index
    %45 = vector.load %arg9[%c0_26, %c224] : memref<16x256xf32, #tpu.memory_space<vmem>>, vector<16x32xf32>
    tpu.vector_store %arg9[%c0_26, %c224], %44 {strides = array<i32>} : memref<16x256xf32, #tpu.memory_space<vmem>>, vector<16x32xf32>,
    %c0_27 = arith.constant 0 : index
    %c0_28 = arith.constant 0 : index
    %46 = vector.load %arg9[%c0_27, %c0_28] : memref<16x256xf32, #tpu.memory_space<vmem>>, vector<16x256xf32>
    %cst_29 = arith.constant 2.000000e+00 : f32
    %47 = vector.broadcast %cst_29 : f32 to vector<16x256xf32>
    %48 = arith.mulf %47, %46 : vector<16x256xf32>
    %49 = math.tanh %48 : vector<16x256xf32>
    %c32_i32 = arith.constant 32 : i32
    %50 = tpu.dynamic_rotate %46 by %c32_i32 dim 1 : vector<16x256xf32>, i32 -> vector<16x256xf32>
    %51 = arith.addf %46, %50 : vector<16x256xf32>
    %52 = math.tanh %51 : vector<16x256xf32>
    %cst_30 = arith.constant 2.000000e+00 : f32
    %53 = vector.broadcast %cst_30 : f32 to vector<16x256xf32>
    %54 = arith.mulf %53, %52 : vector<16x256xf32>
    %55 = arith.addf %49, %54 : vector<16x256xf32>
    %c64_i32 = arith.constant 64 : i32
    %56 = tpu.dynamic_rotate %46 by %c64_i32 dim 1 : vector<16x256xf32>, i32 -> vector<16x256xf32>
    %57 = arith.addf %46, %56 : vector<16x256xf32>
    %58 = math.tanh %57 : vector<16x256xf32>
    %cst_31 = arith.constant 2.000000e+00 : f32
    %59 = vector.broadcast %cst_31 : f32 to vector<16x256xf32>
    %60 = arith.mulf %59, %58 : vector<16x256xf32>
    %61 = arith.addf %55, %60 : vector<16x256xf32>
    %c96_i32 = arith.constant 96 : i32
    %62 = tpu.dynamic_rotate %46 by %c96_i32 dim 1 : vector<16x256xf32>, i32 -> vector<16x256xf32>
    %63 = arith.addf %46, %62 : vector<16x256xf32>
    %64 = math.tanh %63 : vector<16x256xf32>
    %cst_32 = arith.constant 2.000000e+00 : f32
    %65 = vector.broadcast %cst_32 : f32 to vector<16x256xf32>
    %66 = arith.mulf %65, %64 : vector<16x256xf32>
    %67 = arith.addf %61, %66 : vector<16x256xf32>
    %c128_i32 = arith.constant 128 : i32
    %68 = tpu.dynamic_rotate %46 by %c128_i32 dim 1 : vector<16x256xf32>, i32 -> vector<16x256xf32>
    %69 = arith.addf %46, %68 : vector<16x256xf32>
    %70 = math.tanh %69 : vector<16x256xf32>
    %71 = arith.addf %67, %70 : vector<16x256xf32>
    %72 = vector.extract_strided_slice %71 {offsets = [0, 0], sizes = [16, 32], strides = [1, 1]} : vector<16x256xf32> to vector<16x32xf32>
    %73 = vector.extract_strided_slice %71 {offsets = [0, 32], sizes = [16, 32], strides = [1, 1]} : vector<16x256xf32> to vector<16x32xf32>
    %74 = arith.addf %72, %73 : vector<16x32xf32>
    %75 = vector.extract_strided_slice %71 {offsets = [0, 64], sizes = [16, 32], strides = [1, 1]} : vector<16x256xf32> to vector<16x32xf32>
    %76 = arith.addf %74, %75 : vector<16x32xf32>
    %77 = vector.extract_strided_slice %71 {offsets = [0, 96], sizes = [16, 32], strides = [1, 1]} : vector<16x256xf32> to vector<16x32xf32>
    %78 = arith.addf %76, %77 : vector<16x32xf32>
    %79 = vector.extract_strided_slice %71 {offsets = [0, 128], sizes = [16, 32], strides = [1, 1]} : vector<16x256xf32> to vector<16x32xf32>
    %80 = arith.addf %78, %79 : vector<16x32xf32>
    %81 = vector.extract_strided_slice %71 {offsets = [0, 160], sizes = [16, 32], strides = [1, 1]} : vector<16x256xf32> to vector<16x32xf32>
    %82 = arith.addf %80, %81 : vector<16x32xf32>
    %83 = vector.extract_strided_slice %71 {offsets = [0, 192], sizes = [16, 32], strides = [1, 1]} : vector<16x256xf32> to vector<16x32xf32>
    %84 = arith.addf %82, %83 : vector<16x32xf32>
    %85 = vector.extract_strided_slice %71 {offsets = [0, 224], sizes = [16, 32], strides = [1, 1]} : vector<16x256xf32> to vector<16x32xf32>
    %86 = arith.addf %84, %85 : vector<16x32xf32>
    %cst_33 = arith.constant 1.562500e-02 : f32
    %87 = vector.broadcast %cst_33 : f32 to vector<16x32xf32>
    %88 = arith.mulf %86, %87 : vector<16x32xf32>
    %c0_34 = arith.constant 0 : index
    %c0_35 = arith.constant 0 : index
    %89 = vector.load %arg8[%c0_34, %c0_35] : memref<16x32xf32, #tpu.memory_space<vmem>>, vector<16x32xf32>
    tpu.vector_store %arg8[%c0_34, %c0_35], %88 {strides = array<i32>} : memref<16x32xf32, #tpu.memory_space<vmem>>, vector<16x32xf32>,
    return
  }
  func.func @transform_0(%arg0: i32) -> (i32, i32, i32) {
    %c0_i32 = arith.constant 0 : i32
    %c0_i32_0 = arith.constant 0 : i32
    %c0_i32_1 = arith.constant 0 : i32
    return %arg0, %c0_i32, %c0_i32_0 : i32, i32, i32
  }
  func.func @transform_1(%arg0: i32) -> (i32, i32) {
    %c0_i32 = arith.constant 0 : i32
    %c0_i32_0 = arith.constant 0 : i32
    %c0_i32_1 = arith.constant 0 : i32
    return %c0_i32, %c0_i32_0 : i32, i32
  }
  func.func @transform_2(%arg0: i32) -> (i32, i32) {
    %c0_i32 = arith.constant 0 : i32
    %c0_i32_0 = arith.constant 0 : i32
    %c0_i32_1 = arith.constant 0 : i32
    return %c0_i32, %c0_i32_0 : i32, i32
  }
  func.func @transform_3(%arg0: i32) -> (i32, i32) {
    %c0_i32 = arith.constant 0 : i32
    %c0_i32_0 = arith.constant 0 : i32
    %c0_i32_1 = arith.constant 0 : i32
    return %c0_i32, %c0_i32_0 : i32, i32
  }
  func.func @transform_4(%arg0: i32) -> (i32, i32) {
    %c0_i32 = arith.constant 0 : i32
    %c0_i32_0 = arith.constant 0 : i32
    %c0_i32_1 = arith.constant 0 : i32
    return %c0_i32, %c0_i32_0 : i32, i32
  }
  func.func @transform_5(%arg0: i32) -> (i32, i32) {
    %c0_i32 = arith.constant 0 : i32
    %c0_i32_0 = arith.constant 0 : i32
    %c0_i32_1 = arith.constant 0 : i32
    return %c0_i32, %c0_i32_0 : i32, i32
  }
  func.func @transform_6(%arg0: i32) -> (i32, i32) {
    %c0_i32 = arith.constant 0 : i32
    %c0_i32_0 = arith.constant 0 : i32
    %c0_i32_1 = arith.constant 0 : i32
    return %c0_i32, %c0_i32_0 : i32, i32
  }
  func.func @transform_7(%arg0: i32) -> (i32, i32) {
    %c0_i32 = arith.constant 0 : i32
    %c0_i32_0 = arith.constant 0 : i32
    return %arg0, %c0_i32 : i32, i32
  }
}

</mosaic_0001>

<llo_original>
// kernel: tpu_custom_call.1
$region0: #{tpu_custom_call.1}
  #allocation0 [shape = 'u32[]', space=smem, size = 0x4, offset = 0x4, fixed_abs, tag = 'smem constant byte address 0x4 - core index']
  #allocation1 [shape = 'u32[144,128]{1,0:T(1,128)}', space=vmem, size = 0x12000, scoped, tag = 'internal scratch']
  #allocation2 [shape = 'f32[16,256]{1,0:T(8,128)}', space=vmem, size = 0x4000, scoped, tag = 'scratch operand']
  %s0 = inlined_call_operand.hbm [shape: f32[16,8,32], index: 0, kind: input, shape index: {}]
  %s1 = inlined_call_operand.hbm [shape: f32[32,32], index: 1, kind: input, shape index: {}]
  %s2 = inlined_call_operand.vmem [shape: f32[1,32], index: 2, kind: input, shape index: {}]
  %s3 = inlined_call_operand.hbm [shape: f32[32,32], index: 3, kind: input, shape index: {}]
  %s4 = inlined_call_operand.vmem [shape: f32[1,32], index: 4, kind: input, shape index: {}]
  %s5 = inlined_call_operand.hbm [shape: f32[32,32], index: 5, kind: input, shape index: {}]
  %s6 = inlined_call_operand.vmem [shape: f32[1,32], index: 6, kind: input, shape index: {}]
  %s7 = inlined_call_operand.hbm [shape: f32[16,32], index: 7, kind: output, shape index: {}]
  %s8 = sld [smem:[#allocation0]]
  $region54: #{tpu_custom_call.1} parent=0
    _
  %s10 = ssub.s32 1, %s8
  %s11 = scalar_select 0, %s10, %s8
  $region1: #{tpu_custom_call.1} parent=0
    #allocation3 [shape = 'u8[65536]{0}', space=vmem, size = 0x10000, scoped, tag = 'input window, operand 0, single buffered']
    #allocation4 [shape = 's32[1]{0}', space=sflag, size = 0x4, scoped, tag = 'scoped memory for tpu_custom_call.1']
    #allocation5 [shape = 's32[1]{0}', space=sflag, size = 0x4, scoped, tag = 'scoped memory for tpu_custom_call.1']
    #allocation6 [shape = 'u8[16384]{0}', space=vmem, size = 0x4000, scoped, tag = 'input window, operand 1, single buffered']
    #allocation7 [shape = 's32[1]{0}', space=sflag, size = 0x4, scoped, tag = 'scoped memory for tpu_custom_call.1']
    #allocation8 [shape = 'u8[16384]{0}', space=vmem, size = 0x4000, scoped, tag = 'input window, operand 3, single buffered']
    #allocation9 [shape = 'u8[16384]{0}', space=vmem, size = 0x4000, scoped, tag = 'input window, operand 5, single buffered']
    #allocation10 [shape = 's32[1]{0}', space=sflag, size = 0x4, scoped, tag = 'scoped memory for tpu_custom_call.1']
    #allocation11 [shape = 'u8[8192]{0}', space=vmem, size = 0x2000, scoped, tag = 'output window, operand 0, single buffered']
    %12 = vsyncpa [#allocation4], 0
    %13 = vsyncpa [#allocation7], 0
    %14 = vsyncpa [#allocation10], 0
    %15 = vsyncpa [#allocation5], 0
    // Predicated region
    $region2: #{tpu_custom_call.1} parent=1 // pred_check
      _
    $region3: #{tpu_custom_call.1} parent=1 // pred_check_branch
      %17 = sbr.rel (0) target = $region5
    $region4: #{tpu_custom_call.1} parent=1 // pred_region
      %s19 = ssub.s32 2048, 2048
      %20 = vsyncadd [#allocation4], %s19
      %s21 = sshll.u32 [#allocation3], 4
      %s22 = int_to_ptr.vmem [resolvable:$true] %s21
      %27 = dma.hbm_to_vmem [thread:$0]  %s0, 2048, %s22, [#allocation4], 128, 128, 8
    $region5: #{tpu_custom_call.1} parent=1 // pred_fallthru
      _
    // Predicated region
    $region6: #{tpu_custom_call.1} parent=1 // pred_check
      _
    $region7: #{tpu_custom_call.1} parent=1 // pred_check_branch
      %29 = sbr.rel (0) target = $region9
    $region8: #{tpu_custom_call.1} parent=1 // pred_region
      %s31 = ssub.s32 512, 512
      %32 = vsyncadd [#allocation7], %s31
      %s33 = sshll.u32 [#allocation6], 4
      %s34 = int_to_ptr.vmem [resolvable:$true] %s33
      %39 = dma.hbm_to_vmem [thread:$0]  %s1, 512, %s34, [#allocation7], 128, 128, 8
    $region9: #{tpu_custom_call.1} parent=1 // pred_fallthru
      _
    // Predicated region
    $region10: #{tpu_custom_call.1} parent=1 // pred_check
      _
    $region11: #{tpu_custom_call.1} parent=1 // pred_check_branch
      %41 = sbr.rel (0) target = $region13
    $region12: #{tpu_custom_call.1} parent=1 // pred_region
      _
    $region13: #{tpu_custom_call.1} parent=1 // pred_fallthru
      _
    // Predicated region
    $region14: #{tpu_custom_call.1} parent=1 // pred_check
      _
    $region15: #{tpu_custom_call.1} parent=1 // pred_check_branch
      %43 = sbr.rel (0) target = $region17
    $region16: #{tpu_custom_call.1} parent=1 // pred_region
      %s45 = ssub.s32 512, 512
      %46 = vsyncadd [#allocation7], %s45
      %s47 = sshll.u32 [#allocation8], 4
      %s48 = int_to_ptr.vmem [resolvable:$true] %s47
      %53 = dma.hbm_to_vmem [thread:$0]  %s3, 512, %s48, [#allocation7], 128, 128, 8
    $region17: #{tpu_custom_call.1} parent=1 // pred_fallthru
      _
    // Predicated region
    $region18: #{tpu_custom_call.1} parent=1 // pred_check
      _
    $region19: #{tpu_custom_call.1} parent=1 // pred_check_branch
      %55 = sbr.rel (0) target = $region21
    $region20: #{tpu_custom_call.1} parent=1 // pred_region
      _
    $region21: #{tpu_custom_call.1} parent=1 // pred_fallthru
      _
    // Predicated region
    $region22: #{tpu_custom_call.1} parent=1 // pred_check
      _
    $region23: #{tpu_custom_call.1} parent=1 // pred_check_branch
      %57 = sbr.rel (0) target = $region25
    $region24: #{tpu_custom_call.1} parent=1 // pred_region
      %s59 = ssub.s32 512, 512
      %60 = vsyncadd [#allocation10], %s59
      %s61 = sshll.u32 [#allocation9], 4
      %s62 = int_to_ptr.vmem [resolvable:$true] %s61
      %67 = dma.hbm_to_vmem [thread:$0]  %s5, 512, %s62, [#allocation10], 128, 128, 8
    $region25: #{tpu_custom_call.1} parent=1 // pred_fallthru
      _
    // Predicated region
    $region26: #{tpu_custom_call.1} parent=1 // pred_check
      _
    $region27: #{tpu_custom_call.1} parent=1 // pred_check_branch
      %69 = sbr.rel (0) target = $region29
    $region28: #{tpu_custom_call.1} parent=1 // pred_region
      _
    $region29: #{tpu_custom_call.1} parent=1 // pred_fallthru
      _
    // Predicated region
    $region30: #{tpu_custom_call.1} parent=1 // pred_check
      _
    $region31: #{tpu_custom_call.1} parent=1 // pred_check_branch
      %71 = sbr.rel (0) target = $region33
    $region32: #{tpu_custom_call.1} parent=1 // pred_region
      %72 = dma.done [#allocation4], 2048
    $region33: #{tpu_custom_call.1} parent=1 // pred_fallthru
      _
    // Predicated region
    $region34: #{tpu_custom_call.1} parent=1 // pred_check
      _
    $region35: #{tpu_custom_call.1} parent=1 // pred_check_branch
      %74 = sbr.rel (0) target = $region37
    $region36: #{tpu_custom_call.1} parent=1 // pred_region
      %75 = dma.done [#allocation7], 512
    $region37: #{tpu_custom_call.1} parent=1 // pred_fallthru
      _
    // Predicated region
    $region38: #{tpu_custom_call.1} parent=1 // pred_check
      _
    $region39: #{tpu_custom_call.1} parent=1 // pred_check_branch
      %77 = sbr.rel (0) target = $region41
    $region40: #{tpu_custom_call.1} parent=1 // pred_region
      %78 = dma.done [#allocation7], 512
    $region41: #{tpu_custom_call.1} parent=1 // pred_fallthru
      _
    // Predicated region
    $region42: #{tpu_custom_call.1} parent=1 // pred_check
      _
    $region43: #{tpu_custom_call.1} parent=1 // pred_check_branch
      %80 = sbr.rel (0) target = $region45
    $region44: #{tpu_custom_call.1} parent=1 // pred_region
      %81 = dma.done [#allocation10], 512
    $region45: #{tpu_custom_call.1} parent=1 // pred_fallthru
      _
    %v82 = vld [vmem:[#allocation3] sm:$0xff]
    %v83 = vld [vmem:[#allocation3 + $0x8] sm:$0xff]
    %v84 = vld [vmem:[#allocation3 + $0x10] sm:$0xff]
    %v85 = vld [vmem:[#allocation3 + $0x18] sm:$0xff]
    %v86 = vld [vmem:[#allocation3 + $0x20] sm:$0xff]
    %v87 = vld [vmem:[#allocation3 + $0x28] sm:$0xff]
    %v88 = vld [vmem:[#allocation3 + $0x30] sm:$0xff]
    %v89 = vld [vmem:[#allocation3 + $0x38] sm:$0xff]
    %v90 = vld [vmem:[#allocation3 + $0x40] sm:$0xff]
    %v91 = vld [vmem:[#allocation3 + $0x48] sm:$0xff]
    %v92 = vld [vmem:[#allocation3 + $0x50] sm:$0xff]
    %v93 = vld [vmem:[#allocation3 + $0x58] sm:$0xff]
    %v94 = vld [vmem:[#allocation3 + $0x60] sm:$0xff]
    %v95 = vld [vmem:[#allocation3 + $0x68] sm:$0xff]
    %v96 = vld [vmem:[#allocation3 + $0x70] sm:$0xff]
    %v97 = vld [vmem:[#allocation3 + $0x78] sm:$0xff]
    %v98 = vld [vmem:[#allocation6] sm:$0xff]
    %v99 = vld [vmem:[#allocation6 + $0x8] sm:$0xff]
    %v100 = vld [vmem:[#allocation6 + $0x10] sm:$0xff]
    %v101 = vld [vmem:[#allocation6 + $0x18] sm:$0xff]
    %v102 = vld [vmem:[%s2] sm:$0x1]
    %v104 = vlaneseq
    %v105 = vshrl.u32 %v104, 7
    %v106 = vsub.s32 0, %v105
    %v107 = vrot.slane %v102, %v106
    %vm109 = vcmask 261120
    %v111 = vsel %vm109, %v82, 0
    %v114 = vsel %vm109, %v83, 0
    %v117 = vsel %vm109, %v84, 0
    %v120 = vsel %vm109, %v85, 0
    %v123 = vsel %vm109, %v86, 0
    %v126 = vsel %vm109, %v87, 0
    %v129 = vsel %vm109, %v88, 0
    %v132 = vsel %vm109, %v89, 0
    %v135 = vsel %vm109, %v90, 0
    %v138 = vsel %vm109, %v91, 0
    %v141 = vsel %vm109, %v92, 0
    %v144 = vsel %vm109, %v93, 0
    %v147 = vsel %vm109, %v94, 0
    %v150 = vsel %vm109, %v95, 0
    %v153 = vsel %vm109, %v96, 0
    %v156 = vsel %vm109, %v97, 0
    %158 = vmatprep.subr.mxu0 0.0
    %159 = vmatpush1.msra.mxu0 0.0
    %160 = vmatprep.subr.mxu0 0.0
    %161 = vmatpush1.msra.mxu0 0.0
    %162 = vmatprep.subr.mxu0 0.0
    %163 = vmatpush1.msra.mxu0 0.0
    %164 = vmatprep.subr.mxu0 0.0
    %165 = vmatpush1.msra.mxu0 0.0
    %166 = vmatprep.subr.mxu0 0.0
    %167 = vmatpush1.msra.mxu0 0.0
    %168 = vmatprep.subr.mxu0 0.0
    %169 = vmatpush1.msra.mxu0 0.0
    %170 = vmatprep.subr.mxu0 0.0
    %171 = vmatpush1.msra.mxu0 0.0
    %172 = vmatprep.subr.mxu0 0.0
    %173 = vmatpush1.msra.mxu0 0.0
    %174 = vmatprep.subr.mxu0 0.0
    %175 = vmatpush1.msra.mxu0 0.0
    %176 = vmatprep.subr.mxu0 0.0
    %177 = vmatpush1.msra.mxu0 0.0
    %178 = vmatprep.subr.mxu0 0.0
    %179 = vmatpush1.msra.mxu0 0.0
    %180 = vmatprep.subr.mxu0 0.0
    %181 = vmatpush1.msra.mxu0 0.0
    %182 = vmatprep.subr.mxu0 0.0
    %183 = vmatpush1.msra.mxu0 %v101
    %184 = vmatprep.subr.mxu0 0.0
    %185 = vmatpush1.msra.mxu0 %v100
    %186 = vmatprep.subr.mxu0 0.0
    %187 = vmatpush1.msra.mxu0 %v99
    %188 = vmatprep.subr.mxu0 0.0
    %189 = vmatpush1.msra.mxu0 %v98
    %190 = vmatprep.subr.mxu0 0.0
    %191 = vmatpush2.msra.mxu0 0.0
    %192 = vmatprep.subr.mxu0 0.0
    %193 = vmatpush2.msra.mxu0 0.0
    %194 = vmatprep.subr.mxu0 0.0
    %195 = vmatpush2.msra.mxu0 0.0
    %196 = vmatprep.subr.mxu0 0.0
    %197 = vmatpush2.msra.mxu0 0.0
    %198 = vmatprep.subr.mxu0 0.0
    %199 = vmatpush2.msra.mxu0 0.0
    %200 = vmatprep.subr.mxu0 0.0
    %201 = vmatpush2.msra.mxu0 0.0
    %202 = vmatprep.subr.mxu0 0.0
    %203 = vmatpush2.msra.mxu0 0.0
    %204 = vmatprep.subr.mxu0 0.0
    %205 = vmatpush2.msra.mxu0 0.0
    %206 = vmatprep.subr.mxu0 0.0
    %207 = vmatpush2.msra.mxu0 0.0
    %208 = vmatprep.subr.mxu0 0.0
    %209 = vmatpush2.msra.mxu0 0.0
    %210 = vmatprep.subr.mxu0 0.0
    %211 = vmatpush2.msra.mxu0 0.0
    %212 = vmatprep.subr.mxu0 0.0
    %213 = vmatpush2.msra.mxu0 0.0
    %214 = vmatprep.subr.mxu0 0.0
    %215 = vmatpush2.msra.mxu0 0.0
    %216 = vmatprep.subr.mxu0 0.0
    %217 = vmatpush2.msra.mxu0 0.0
    %218 = vmatprep.subr.mxu0 0.0
    %219 = vmatpush2.msra.mxu0 0.0
    %220 = vmatprep.subr.mxu0 0.0
    %221 = vmatpush2.msra.mxu0 0.0
    %222 = vmatprep.mubr.f32.mxu0 0.0
    %223 = vmatmul.mubr.f32.gmra.mxu0 %v111
    %v224 = vpop.f32.mrf.mxu0
    %v225 = vadd.f32 %v107, %v224
    %v226 = vpop.f32.mrf.mxu0
    %227 = vmatprep.mubr.f32.mxu0 0.0
    %228 = vmatmul.mubr.f32.gmra.mxu0 %v114
    %v229 = vpop.f32.mrf.mxu0
    %v230 = vadd.f32 %v107, %v229
    %v231 = vpop.f32.mrf.mxu0
    %232 = vmatprep.mubr.f32.mxu0 0.0
    %233 = vmatmul.mubr.f32.gmra.mxu0 %v117
    %v234 = vpop.f32.mrf.mxu0
    %v235 = vadd.f32 %v107, %v234
    %v236 = vpop.f32.mrf.mxu0
    %237 = vmatprep.mubr.f32.mxu0 0.0
    %238 = vmatmul.mubr.f32.gmra.mxu0 %v120
    %v239 = vpop.f32.mrf.mxu0
    %v240 = vadd.f32 %v107, %v239
    %v241 = vpop.f32.mrf.mxu0
    %242 = vmatprep.mubr.f32.mxu0 0.0
    %243 = vmatmul.mubr.f32.gmra.mxu0 %v123
    %v244 = vpop.f32.mrf.mxu0
    %v245 = vadd.f32 %v107, %v244
    %v246 = vpop.f32.mrf.mxu0
    %247 = vmatprep.mubr.f32.mxu0 0.0
    %248 = vmatmul.mubr.f32.gmra.mxu0 %v126
    %v249 = vpop.f32.mrf.mxu0
    %v250 = vadd.f32 %v107, %v249
    %v251 = vpop.f32.mrf.mxu0
    %252 = vmatprep.mubr.f32.mxu0 0.0
    %253 = vmatmul.mubr.f32.gmra.mxu0 %v129
    %v254 = vpop.f32.mrf.mxu0
    %v255 = vadd.f32 %v107, %v254
    %v256 = vpop.f32.mrf.mxu0
    %257 = vmatprep.mubr.f32.mxu0 0.0
    %258 = vmatmul.mubr.f32.gmra.mxu0 %v132
    %v259 = vpop.f32.mrf.mxu0
    %v260 = vadd.f32 %v107, %v259
    %v261 = vpop.f32.mrf.mxu0
    %262 = vmatprep.mubr.f32.mxu0 0.0
    %263 = vmatmul.mubr.f32.gmra.mxu0 %v135
    %v264 = vpop.f32.mrf.mxu0
    %v265 = vadd.f32 %v107, %v264
    %v266 = vpop.f32.mrf.mxu0
    %267 = vmatprep.mubr.f32.mxu0 0.0
    %268 = vmatmul.mubr.f32.gmra.mxu0 %v138
    %v269 = vpop.f32.mrf.mxu0
    %v270 = vadd.f32 %v107, %v269
    %v271 = vpop.f32.mrf.mxu0
    %272 = vmatprep.mubr.f32.mxu0 0.0
    %273 = vmatmul.mubr.f32.gmra.mxu0 %v141
    %v274 = vpop.f32.mrf.mxu0
    %v275 = vadd.f32 %v107, %v274
    %v276 = vpop.f32.mrf.mxu0
    %277 = vmatprep.mubr.f32.mxu0 0.0
    %278 = vmatmul.mubr.f32.gmra.mxu0 %v144
    %v279 = vpop.f32.mrf.mxu0
    %v280 = vadd.f32 %v107, %v279
    %v281 = vpop.f32.mrf.mxu0
    %282 = vmatprep.mubr.f32.mxu0 0.0
    %283 = vmatmul.mubr.f32.gmra.mxu0 %v147
    %v284 = vpop.f32.mrf.mxu0
    %v285 = vadd.f32 %v107, %v284
    %v286 = vpop.f32.mrf.mxu0
    %287 = vmatprep.mubr.f32.mxu0 0.0
    %288 = vmatmul.mubr.f32.gmra.mxu0 %v150
    %v289 = vpop.f32.mrf.mxu0
    %v290 = vadd.f32 %v107, %v289
    %v291 = vpop.f32.mrf.mxu0
    %292 = vmatprep.mubr.f32.mxu0 0.0
    %293 = vmatmul.mubr.f32.gmra.mxu0 %v153
    %v294 = vpop.f32.mrf.mxu0
    %v295 = vadd.f32 %v107, %v294
    %v296 = vpop.f32.mrf.mxu0
    %297 = vmatprep.mubr.f32.mxu0 0.0
    %298 = vmatmul.mubr.f32.gmra.mxu0 %v156
    %v299 = vpop.f32.mrf.mxu0
    %v300 = vadd.f32 %v107, %v299
    %v301 = vpop.f32.mrf.mxu0
    %302 = vdwg.mxu0
    %v303 = vmax.f32 %v225, 0.0
    %v304 = vmax.f32 %v230, 0.0
    %v305 = vmax.f32 %v235, 0.0
    %v306 = vmax.f32 %v240, 0.0
    %v307 = vmax.f32 %v245, 0.0
    %v308 = vmax.f32 %v250, 0.0
    %v309 = vmax.f32 %v255, 0.0
    %v310 = vmax.f32 %v260, 0.0
    %v311 = vmax.f32 %v265, 0.0
    %v312 = vmax.f32 %v270, 0.0
    %v313 = vmax.f32 %v275, 0.0
    %v314 = vmax.f32 %v280, 0.0
    %v315 = vmax.f32 %v285, 0.0
    %v316 = vmax.f32 %v290, 0.0
    %v317 = vmax.f32 %v295, 0.0
    %v318 = vmax.f32 %v300, 0.0
    %v319 = vld [vmem:[#allocation8] sm:$0xff]
    %v320 = vld [vmem:[#allocation8 + $0x8] sm:$0xff]
    %v321 = vld [vmem:[#allocation8 + $0x10] sm:$0xff]
    %v322 = vld [vmem:[#allocation8 + $0x18] sm:$0xff]
    %v323 = vld [vmem:[%s4] sm:$0x1]
    %v325 = vlaneseq
    %v326 = vshrl.u32 %v325, 7
    %v327 = vsub.s32 0, %v326
    %v328 = vrot.slane %v323, %v327
    %v331 = vsel %vm109, %v303, 0
    %v334 = vsel %vm109, %v304, 0
    %v337 = vsel %vm109, %v305, 0
    %v340 = vsel %vm109, %v306, 0
    %v343 = vsel %vm109, %v307, 0
    %v346 = vsel %vm109, %v308, 0
    %v349 = vsel %vm109, %v309, 0
    %v352 = vsel %vm109, %v310, 0
    %v355 = vsel %vm109, %v311, 0
    %v358 = vsel %vm109, %v312, 0
    %v361 = vsel %vm109, %v313, 0
    %v364 = vsel %vm109, %v314, 0
    %v367 = vsel %vm109, %v315, 0
    %v370 = vsel %vm109, %v316, 0
    %v373 = vsel %vm109, %v317, 0
    %v376 = vsel %vm109, %v318, 0
    %378 = vmatprep.subr.mxu0 0.0
    %379 = vmatpush1.msra.mxu0 0.0
    %380 = vmatprep.subr.mxu0 0.0
    %381 = vmatpush1.msra.mxu0 0.0
    %382 = vmatprep.subr.mxu0 0.0
    %383 = vmatpush1.msra.mxu0 0.0
    %384 = vmatprep.subr.mxu0 0.0
    %385 = vmatpush1.msra.mxu0 0.0
    %386 = vmatprep.subr.mxu0 0.0
    %387 = vmatpush1.msra.mxu0 0.0
    %388 = vmatprep.subr.mxu0 0.0
    %389 = vmatpush1.msra.mxu0 0.0
    %390 = vmatprep.subr.mxu0 0.0
    %391 = vmatpush1.msra.mxu0 0.0
    %392 = vmatprep.subr.mxu0 0.0
    %393 = vmatpush1.msra.mxu0 0.0
    %394 = vmatprep.subr.mxu0 0.0
    %395 = vmatpush1.msra.mxu0 0.0
    %396 = vmatprep.subr.mxu0 0.0
    %397 = vmatpush1.msra.mxu0 0.0
    %398 = vmatprep.subr.mxu0 0.0
    %399 = vmatpush1.msra.mxu0 0.0
    %400 = vmatprep.subr.mxu0 0.0
    %401 = vmatpush1.msra.mxu0 0.0
    %402 = vmatprep.subr.mxu0 0.0
    %403 = vmatpush1.msra.mxu0 %v322
    %404 = vmatprep.subr.mxu0 0.0
    %405 = vmatpush1.msra.mxu0 %v321
    %406 = vmatprep.subr.mxu0 0.0
    %407 = vmatpush1.msra.mxu0 %v320
    %408 = vmatprep.subr.mxu0 0.0
    %409 = vmatpush1.msra.mxu0 %v319
    %410 = vmatprep.subr.mxu0 0.0
    %411 = vmatpush2.msra.mxu0 0.0
    %412 = vmatprep.subr.mxu0 0.0
    %413 = vmatpush2.msra.mxu0 0.0
    %414 = vmatprep.subr.mxu0 0.0
    %415 = vmatpush2.msra.mxu0 0.0
    %416 = vmatprep.subr.mxu0 0.0
    %417 = vmatpush2.msra.mxu0 0.0
    %418 = vmatprep.subr.mxu0 0.0
    %419 = vmatpush2.msra.mxu0 0.0
    %420 = vmatprep.subr.mxu0 0.0
    %421 = vmatpush2.msra.mxu0 0.0
    %422 = vmatprep.subr.mxu0 0.0
    %423 = vmatpush2.msra.mxu0 0.0
    %424 = vmatprep.subr.mxu0 0.0
    %425 = vmatpush2.msra.mxu0 0.0
    %426 = vmatprep.subr.mxu0 0.0
    %427 = vmatpush2.msra.mxu0 0.0
    %428 = vmatprep.subr.mxu0 0.0
    %429 = vmatpush2.msra.mxu0 0.0
    %430 = vmatprep.subr.mxu0 0.0
    %431 = vmatpush2.msra.mxu0 0.0
    %432 = vmatprep.subr.mxu0 0.0
    %433 = vmatpush2.msra.mxu0 0.0
    %434 = vmatprep.subr.mxu0 0.0
    %435 = vmatpush2.msra.mxu0 0.0
    %436 = vmatprep.subr.mxu0 0.0
    %437 = vmatpush2.msra.mxu0 0.0
    %438 = vmatprep.subr.mxu0 0.0
    %439 = vmatpush2.msra.mxu0 0.0
    %440 = vmatprep.subr.mxu0 0.0
    %441 = vmatpush2.msra.mxu0 0.0
    %442 = vmatprep.mubr.f32.mxu0 0.0
    %443 = vmatmul.mubr.f32.gmra.mxu0 %v331
    %v444 = vpop.f32.mrf.mxu0
    %v445 = vadd.f32 %v328, %v444
    %v446 = vpop.f32.mrf.mxu0
    %447 = vmatprep.mubr.f32.mxu0 0.0
    %448 = vmatmul.mubr.f32.gmra.mxu0 %v334
    %v449 = vpop.f32.mrf.mxu0
    %v450 = vadd.f32 %v328, %v449
    %v451 = vpop.f32.mrf.mxu0
    %452 = vmatprep.mubr.f32.mxu0 0.0
    %453 = vmatmul.mubr.f32.gmra.mxu0 %v337
    %v454 = vpop.f32.mrf.mxu0
    %v455 = vadd.f32 %v328, %v454
    %v456 = vpop.f32.mrf.mxu0
    %457 = vmatprep.mubr.f32.mxu0 0.0
    %458 = vmatmul.mubr.f32.gmra.mxu0 %v340
    %v459 = vpop.f32.mrf.mxu0
    %v460 = vadd.f32 %v328, %v459
    %v461 = vpop.f32.mrf.mxu0
    %462 = vmatprep.mubr.f32.mxu0 0.0
    %463 = vmatmul.mubr.f32.gmra.mxu0 %v343
    %v464 = vpop.f32.mrf.mxu0
    %v465 = vadd.f32 %v328, %v464
    %v466 = vpop.f32.mrf.mxu0
    %467 = vmatprep.mubr.f32.mxu0 0.0
    %468 = vmatmul.mubr.f32.gmra.mxu0 %v346
    %v469 = vpop.f32.mrf.mxu0
    %v470 = vadd.f32 %v328, %v469
    %v471 = vpop.f32.mrf.mxu0
    %472 = vmatprep.mubr.f32.mxu0 0.0
    %473 = vmatmul.mubr.f32.gmra.mxu0 %v349
    %v474 = vpop.f32.mrf.mxu0
    %v475 = vadd.f32 %v328, %v474
    %v476 = vpop.f32.mrf.mxu0
    %477 = vmatprep.mubr.f32.mxu0 0.0
    %478 = vmatmul.mubr.f32.gmra.mxu0 %v352
    %v479 = vpop.f32.mrf.mxu0
    %v480 = vadd.f32 %v328, %v479
    %v481 = vpop.f32.mrf.mxu0
    %482 = vmatprep.mubr.f32.mxu0 0.0
    %483 = vmatmul.mubr.f32.gmra.mxu0 %v355
    %v484 = vpop.f32.mrf.mxu0
    %v485 = vadd.f32 %v328, %v484
    %v486 = vpop.f32.mrf.mxu0
    %487 = vmatprep.mubr.f32.mxu0 0.0
    %488 = vmatmul.mubr.f32.gmra.mxu0 %v358
    %v489 = vpop.f32.mrf.mxu0
    %v490 = vadd.f32 %v328, %v489
    %v491 = vpop.f32.mrf.mxu0
    %492 = vmatprep.mubr.f32.mxu0 0.0
    %493 = vmatmul.mubr.f32.gmra.mxu0 %v361
    %v494 = vpop.f32.mrf.mxu0
    %v495 = vadd.f32 %v328, %v494
    %v496 = vpop.f32.mrf.mxu0
    %497 = vmatprep.mubr.f32.mxu0 0.0
    %498 = vmatmul.mubr.f32.gmra.mxu0 %v364
    %v499 = vpop.f32.mrf.mxu0
    %v500 = vadd.f32 %v328, %v499
    %v501 = vpop.f32.mrf.mxu0
    %502 = vmatprep.mubr.f32.mxu0 0.0
    %503 = vmatmul.mubr.f32.gmra.mxu0 %v367
    %v504 = vpop.f32.mrf.mxu0
    %v505 = vadd.f32 %v328, %v504
    %v506 = vpop.f32.mrf.mxu0
    %507 = vmatprep.mubr.f32.mxu0 0.0
    %508 = vmatmul.mubr.f32.gmra.mxu0 %v370
    %v509 = vpop.f32.mrf.mxu0
    %v510 = vadd.f32 %v328, %v509
    %v511 = vpop.f32.mrf.mxu0
    %512 = vmatprep.mubr.f32.mxu0 0.0
    %513 = vmatmul.mubr.f32.gmra.mxu0 %v373
    %v514 = vpop.f32.mrf.mxu0
    %v515 = vadd.f32 %v328, %v514
    %v516 = vpop.f32.mrf.mxu0
    %517 = vmatprep.mubr.f32.mxu0 0.0
    %518 = vmatmul.mubr.f32.gmra.mxu0 %v376
    %v519 = vpop.f32.mrf.mxu0
    %v520 = vadd.f32 %v328, %v519
    %v521 = vpop.f32.mrf.mxu0
    %522 = vdwg.mxu0
    %v523 = vmax.f32 %v445, 0.0
    %v524 = vmax.f32 %v450, 0.0
    %v525 = vmax.f32 %v455, 0.0
    %v526 = vmax.f32 %v460, 0.0
    %v527 = vmax.f32 %v465, 0.0
    %v528 = vmax.f32 %v470, 0.0
    %v529 = vmax.f32 %v475, 0.0
    %v530 = vmax.f32 %v480, 0.0
    %v531 = vmax.f32 %v485, 0.0
    %v532 = vmax.f32 %v490, 0.0
    %v533 = vmax.f32 %v495, 0.0
    %v534 = vmax.f32 %v500, 0.0
    %v535 = vmax.f32 %v505, 0.0
    %v536 = vmax.f32 %v510, 0.0
    %v537 = vmax.f32 %v515, 0.0
    %v538 = vmax.f32 %v520, 0.0
    %v539 = vld [vmem:[#allocation9] sm:$0xff]
    %v540 = vld [vmem:[#allocation9 + $0x8] sm:$0xff]
    %v541 = vld [vmem:[#allocation9 + $0x10] sm:$0xff]
    %v542 = vld [vmem:[#allocation9 + $0x18] sm:$0xff]
    %v543 = vld [vmem:[%s6] sm:$0x1]
    %v545 = vlaneseq
    %v546 = vshrl.u32 %v545, 7
    %v547 = vsub.s32 0, %v546
    %v548 = vrot.slane %v543, %v547
    %v551 = vsel %vm109, %v523, 0
    %v554 = vsel %vm109, %v524, 0
    %v557 = vsel %vm109, %v525, 0
    %v560 = vsel %vm109, %v526, 0
    %v563 = vsel %vm109, %v527, 0
    %v566 = vsel %vm109, %v528, 0
    %v569 = vsel %vm109, %v529, 0
    %v572 = vsel %vm109, %v530, 0
    %v575 = vsel %vm109, %v531, 0
    %v578 = vsel %vm109, %v532, 0
    %v581 = vsel %vm109, %v533, 0
    %v584 = vsel %vm109, %v534, 0
    %v587 = vsel %vm109, %v535, 0
    %v590 = vsel %vm109, %v536, 0
    %v593 = vsel %vm109, %v537, 0
    %v596 = vsel %vm109, %v538, 0
    %598 = vmatprep.subr.mxu0 0.0
    %599 = vmatpush1.msra.mxu0 0.0
    %600 = vmatprep.subr.mxu0 0.0
    %601 = vmatpush1.msra.mxu0 0.0
    %602 = vmatprep.subr.mxu0 0.0
    %603 = vmatpush1.msra.mxu0 0.0
    %604 = vmatprep.subr.mxu0 0.0
    %605 = vmatpush1.msra.mxu0 0.0
    %606 = vmatprep.subr.mxu0 0.0
    %607 = vmatpush1.msra.mxu0 0.0
    %608 = vmatprep.subr.mxu0 0.0
    %609 = vmatpush1.msra.mxu0 0.0
    %610 = vmatprep.subr.mxu0 0.0
    %611 = vmatpush1.msra.mxu0 0.0
    %612 = vmatprep.subr.mxu0 0.0
    %613 = vmatpush1.msra.mxu0 0.0
    %614 = vmatprep.subr.mxu0 0.0
    %615 = vmatpush1.msra.mxu0 0.0
    %616 = vmatprep.subr.mxu0 0.0
    %617 = vmatpush1.msra.mxu0 0.0
    %618 = vmatprep.subr.mxu0 0.0
    %619 = vmatpush1.msra.mxu0 0.0
    %620 = vmatprep.subr.mxu0 0.0
    %621 = vmatpush1.msra.mxu0 0.0
    %622 = vmatprep.subr.mxu0 0.0
    %623 = vmatpush1.msra.mxu0 %v542
    %624 = vmatprep.subr.mxu0 0.0
    %625 = vmatpush1.msra.mxu0 %v541
    %626 = vmatprep.subr.mxu0 0.0
    %627 = vmatpush1.msra.mxu0 %v540
    %628 = vmatprep.subr.mxu0 0.0
    %629 = vmatpush1.msra.mxu0 %v539
    %630 = vmatprep.subr.mxu0 0.0
    %631 = vmatpush2.msra.mxu0 0.0
    %632 = vmatprep.subr.mxu0 0.0
    %633 = vmatpush2.msra.mxu0 0.0
    %634 = vmatprep.subr.mxu0 0.0
    %635 = vmatpush2.msra.mxu0 0.0
    %636 = vmatprep.subr.mxu0 0.0
    %637 = vmatpush2.msra.mxu0 0.0
    %638 = vmatprep.subr.mxu0 0.0
    %639 = vmatpush2.msra.mxu0 0.0
    %640 = vmatprep.subr.mxu0 0.0
    %641 = vmatpush2.msra.mxu0 0.0
    %642 = vmatprep.subr.mxu0 0.0
    %643 = vmatpush2.msra.mxu0 0.0
    %644 = vmatprep.subr.mxu0 0.0
    %645 = vmatpush2.msra.mxu0 0.0
    %646 = vmatprep.subr.mxu0 0.0
    %647 = vmatpush2.msra.mxu0 0.0
    %648 = vmatprep.subr.mxu0 0.0
    %649 = vmatpush2.msra.mxu0 0.0
    %650 = vmatprep.subr.mxu0 0.0
    %651 = vmatpush2.msra.mxu0 0.0
    %652 = vmatprep.subr.mxu0 0.0
    %653 = vmatpush2.msra.mxu0 0.0
    %654 = vmatprep.subr.mxu0 0.0
    %655 = vmatpush2.msra.mxu0 0.0
    %656 = vmatprep.subr.mxu0 0.0
    %657 = vmatpush2.msra.mxu0 0.0
    %658 = vmatprep.subr.mxu0 0.0
    %659 = vmatpush2.msra.mxu0 0.0
    %660 = vmatprep.subr.mxu0 0.0
    %661 = vmatpush2.msra.mxu0 0.0
    %662 = vmatprep.mubr.f32.mxu0 0.0
    %663 = vmatmul.mubr.f32.gmra.mxu0 %v551
    %v664 = vpop.f32.mrf.mxu0
    %v665 = vadd.f32 %v548, %v664
    %v666 = vpop.f32.mrf.mxu0
    %667 = vmatprep.mubr.f32.mxu0 0.0
    %668 = vmatmul.mubr.f32.gmra.mxu0 %v554
    %v669 = vpop.f32.mrf.mxu0
    %v670 = vadd.f32 %v548, %v669
    %v671 = vpop.f32.mrf.mxu0
    %672 = vmatprep.mubr.f32.mxu0 0.0
    %673 = vmatmul.mubr.f32.gmra.mxu0 %v557
    %v674 = vpop.f32.mrf.mxu0
    %v675 = vadd.f32 %v548, %v674
    %v676 = vpop.f32.mrf.mxu0
    %677 = vmatprep.mubr.f32.mxu0 0.0
    %678 = vmatmul.mubr.f32.gmra.mxu0 %v560
    %v679 = vpop.f32.mrf.mxu0
    %v680 = vadd.f32 %v548, %v679
    %v681 = vpop.f32.mrf.mxu0
    %682 = vmatprep.mubr.f32.mxu0 0.0
    %683 = vmatmul.mubr.f32.gmra.mxu0 %v563
    %v684 = vpop.f32.mrf.mxu0
    %v685 = vadd.f32 %v548, %v684
    %v686 = vpop.f32.mrf.mxu0
    %687 = vmatprep.mubr.f32.mxu0 0.0
    %688 = vmatmul.mubr.f32.gmra.mxu0 %v566
    %v689 = vpop.f32.mrf.mxu0
    %v690 = vadd.f32 %v548, %v689
    %v691 = vpop.f32.mrf.mxu0
    %692 = vmatprep.mubr.f32.mxu0 0.0
    %693 = vmatmul.mubr.f32.gmra.mxu0 %v569
    %v694 = vpop.f32.mrf.mxu0
    %v695 = vadd.f32 %v548, %v694
    %v696 = vpop.f32.mrf.mxu0
    %697 = vmatprep.mubr.f32.mxu0 0.0
    %698 = vmatmul.mubr.f32.gmra.mxu0 %v572
    %v699 = vpop.f32.mrf.mxu0
    %v700 = vadd.f32 %v548, %v699
    %v701 = vpop.f32.mrf.mxu0
    %702 = vmatprep.mubr.f32.mxu0 0.0
    %703 = vmatmul.mubr.f32.gmra.mxu0 %v575
    %v704 = vpop.f32.mrf.mxu0
    %v705 = vadd.f32 %v548, %v704
    %v706 = vpop.f32.mrf.mxu0
    %707 = vmatprep.mubr.f32.mxu0 0.0
    %708 = vmatmul.mubr.f32.gmra.mxu0 %v578
    %v709 = vpop.f32.mrf.mxu0
    %v710 = vadd.f32 %v548, %v709
    %v711 = vpop.f32.mrf.mxu0
    %712 = vmatprep.mubr.f32.mxu0 0.0
    %713 = vmatmul.mubr.f32.gmra.mxu0 %v581
    %v714 = vpop.f32.mrf.mxu0
    %v715 = vadd.f32 %v548, %v714
    %v716 = vpop.f32.mrf.mxu0
    %717 = vmatprep.mubr.f32.mxu0 0.0
    %718 = vmatmul.mubr.f32.gmra.mxu0 %v584
    %v719 = vpop.f32.mrf.mxu0
    %v720 = vadd.f32 %v548, %v719
    %v721 = vpop.f32.mrf.mxu0
    %722 = vmatprep.mubr.f32.mxu0 0.0
    %723 = vmatmul.mubr.f32.gmra.mxu0 %v587
    %v724 = vpop.f32.mrf.mxu0
    %v725 = vadd.f32 %v548, %v724
    %v726 = vpop.f32.mrf.mxu0
    %727 = vmatprep.mubr.f32.mxu0 0.0
    %728 = vmatmul.mubr.f32.gmra.mxu0 %v590
    %v729 = vpop.f32.mrf.mxu0
    %v730 = vadd.f32 %v548, %v729
    %v731 = vpop.f32.mrf.mxu0
    %732 = vmatprep.mubr.f32.mxu0 0.0
    %733 = vmatmul.mubr.f32.gmra.mxu0 %v593
    %v734 = vpop.f32.mrf.mxu0
    %v735 = vadd.f32 %v548, %v734
    %v736 = vpop.f32.mrf.mxu0
    %737 = vmatprep.mubr.f32.mxu0 0.0
    %738 = vmatmul.mubr.f32.gmra.mxu0 %v596
    %v739 = vpop.f32.mrf.mxu0
    %v740 = vadd.f32 %v548, %v739
    %v741 = vpop.f32.mrf.mxu0
    %742 = vdwg.mxu0
    %v759 = vrot.slane %v670, 7
    %vm760 = vcmask 1041409
    %v761 = vsel %vm760, %v759, %v665
    %v762 = vrot.slane %v675, 6
    %vm763 = vcmask 1042434
    %v764 = vsel %vm763, %v762, %v761
    %v765 = vrot.slane %v680, 5
    %vm766 = vcmask 1043459
    %v767 = vsel %vm766, %v765, %v764
    %v768 = vrot.slane %v685, 4
    %vm769 = vcmask 1044484
    %v770 = vsel %vm769, %v768, %v767
    %v771 = vrot.slane %v690, 3
    %vm772 = vcmask 1045509
    %v773 = vsel %vm772, %v771, %v770
    %v774 = vrot.slane %v695, 2
    %vm775 = vcmask 1046534
    %v776 = vsel %vm775, %v774, %v773
    %v777 = vrot.slane %v700, 1
    %vm778 = vcmask 1047559
    %v779 = vsel %vm778, %v777, %v776
    %v780 = vrot.slane %v710, 7
    %v781 = vsel %vm760, %v780, %v705
    %v782 = vrot.slane %v715, 6
    %v783 = vsel %vm763, %v782, %v781
    %v784 = vrot.slane %v720, 5
    %v785 = vsel %vm766, %v784, %v783
    %v786 = vrot.slane %v725, 4
    %v787 = vsel %vm769, %v786, %v785
    %v788 = vrot.slane %v730, 3
    %v789 = vsel %vm772, %v788, %v787
    %v790 = vrot.slane %v735, 2
    %v791 = vsel %vm775, %v790, %v789
    %v792 = vrot.slane %v740, 1
    %v793 = vsel %vm778, %v792, %v791
    %796 = vst.msk [vmem:[#allocation2] sm:$0xff] %vm109, %v779
    %797 = vst.msk [vmem:[#allocation2 + $0x10] sm:$0xff] %vm109, %v793
    %v798 = vrot.slane %v665, 1
    %v799 = vsel %vm760, %v670, %v798
    %v800 = vrot.slane %v675, 7
    %v801 = vsel %vm763, %v800, %v799
    %v802 = vrot.slane %v680, 6
    %v803 = vsel %vm766, %v802, %v801
    %v804 = vrot.slane %v685, 5
    %v805 = vsel %vm769, %v804, %v803
    %v806 = vrot.slane %v690, 4
    %v807 = vsel %vm772, %v806, %v805
    %v808 = vrot.slane %v695, 3
    %v809 = vsel %vm775, %v808, %v807
    %v810 = vrot.slane %v700, 2
    %v811 = vsel %vm778, %v810, %v809
    %v812 = vrot.slane %v705, 1
    %v813 = vsel %vm760, %v710, %v812
    %v814 = vrot.slane %v715, 7
    %v815 = vsel %vm763, %v814, %v813
    %v816 = vrot.slane %v720, 6
    %v817 = vsel %vm766, %v816, %v815
    %v818 = vrot.slane %v725, 5
    %v819 = vsel %vm769, %v818, %v817
    %v820 = vrot.slane %v730, 4
    %v821 = vsel %vm772, %v820, %v819
    %v822 = vrot.slane %v735, 3
    %v823 = vsel %vm775, %v822, %v821
    %v824 = vrot.slane %v740, 2
    %v825 = vsel %vm778, %v824, %v823
    %826 = vrot.lane.b32.xlu0 %v811, 32
    %v827 = vpop.permute.xlu0 %826
    %828 = vrot.lane.b32.xlu0 %v825, 32
    %v829 = vpop.permute.xlu0 %828
    %vm832 = vcmask 523520
    %833 = vst.msk [vmem:[#allocation2] sm:$0xff] %vm832, %v827
    %834 = vst.msk [vmem:[#allocation2 + $0x10] sm:$0xff] %vm832, %v829
    %v835 = vrot.slane %v665, 2
    %v836 = vrot.slane %v670, 1
    %v837 = vsel %vm760, %v836, %v835
    %v838 = vsel %vm763, %v675, %v837
    %v839 = vrot.slane %v680, 7
    %v840 = vsel %vm766, %v839, %v838
    %v841 = vrot.slane %v685, 6
    %v842 = vsel %vm769, %v841, %v840
    %v843 = vrot.slane %v690, 5
    %v844 = vsel %vm772, %v843, %v842
    %v845 = vrot.slane %v695, 4
    %v846 = vsel %vm775, %v845, %v844
    %v847 = vrot.slane %v700, 3
    %v848 = vsel %vm778, %v847, %v846
    %v849 = vrot.slane %v705, 2
    %v850 = vrot.slane %v710, 1
    %v851 = vsel %vm760, %v850, %v849
    %v852 = vsel %vm763, %v715, %v851
    %v853 = vrot.slane %v720, 7
    %v854 = vsel %vm766, %v853, %v852
    %v855 = vrot.slane %v725, 6
    %v856 = vsel %vm769, %v855, %v854
    %v857 = vrot.slane %v730, 5
    %v858 = vsel %vm772, %v857, %v856
    %v859 = vrot.slane %v735, 4
    %v860 = vsel %vm775, %v859, %v858
    %v861 = vrot.slane %v740, 3
    %v862 = vsel %vm778, %v861, %v860
    %863 = vrot.lane.b32.xlu0 %v848, 64
    %v864 = vpop.permute.xlu0 %863
    %865 = vrot.lane.b32.xlu0 %v862, 64
    %v866 = vpop.permute.xlu0 %865
    %vm869 = vcmask 785920
    %870 = vst.msk [vmem:[#allocation2] sm:$0xff] %vm869, %v864
    %871 = vst.msk [vmem:[#allocation2 + $0x10] sm:$0xff] %vm869, %v866
    %v872 = vrot.slane %v665, 3
    %v873 = vrot.slane %v670, 2
    %v874 = vsel %vm760, %v873, %v872
    %v875 = vrot.slane %v675, 1
    %v876 = vsel %vm763, %v875, %v874
    %v877 = vsel %vm766, %v680, %v876
    %v878 = vrot.slane %v685, 7
    %v879 = vsel %vm769, %v878, %v877
    %v880 = vrot.slane %v690, 6
    %v881 = vsel %vm772, %v880, %v879
    %v882 = vrot.slane %v695, 5
    %v883 = vsel %vm775, %v882, %v881
    %v884 = vrot.slane %v700, 4
    %v885 = vsel %vm778, %v884, %v883
    %v886 = vrot.slane %v705, 3
    %v887 = vrot.slane %v710, 2
    %v888 = vsel %vm760, %v887, %v886
    %v889 = vrot.slane %v715, 1
    %v890 = vsel %vm763, %v889, %v888
    %v891 = vsel %vm766, %v720, %v890
    %v892 = vrot.slane %v725, 7
    %v893 = vsel %vm769, %v892, %v891
    %v894 = vrot.slane %v730, 6
    %v895 = vsel %vm772, %v894, %v893
    %v896 = vrot.slane %v735, 5
    %v897 = vsel %vm775, %v896, %v895
    %v898 = vrot.slane %v740, 4
    %v899 = vsel %vm778, %v898, %v897
    %900 = vrot.lane.b32.xlu0 %v885, 96
    %v901 = vpop.permute.xlu0 %900
    %902 = vrot.lane.b32.xlu0 %v899, 96
    %v903 = vpop.permute.xlu0 %902
    %vm906 = vcmask 1048320
    %907 = vst.msk [vmem:[#allocation2] sm:$0xff] %vm906, %v901
    %908 = vst.msk [vmem:[#allocation2 + $0x10] sm:$0xff] %vm906, %v903
    %v909 = vrot.slane %v665, 4
    %v910 = vrot.slane %v670, 3
    %v911 = vsel %vm760, %v910, %v909
    %v912 = vrot.slane %v675, 2
    %v913 = vsel %vm763, %v912, %v911
    %v914 = vrot.slane %v680, 1
    %v915 = vsel %vm766, %v914, %v913
    %v916 = vsel %vm769, %v685, %v915
    %v917 = vrot.slane %v690, 7
    %v918 = vsel %vm772, %v917, %v916
    %v919 = vrot.slane %v695, 6
    %v920 = vsel %vm775, %v919, %v918
    %v921 = vrot.slane %v700, 5
    %v922 = vsel %vm778, %v921, %v920
    %v923 = vrot.slane %v705, 4
    %v924 = vrot.slane %v710, 3
    %v925 = vsel %vm760, %v924, %v923
    %v926 = vrot.slane %v715, 2
    %v927 = vsel %vm763, %v926, %v925
    %v928 = vrot.slane %v720, 1
    %v929 = vsel %vm766, %v928, %v927
    %v930 = vsel %vm769, %v725, %v929
    %v931 = vrot.slane %v730, 7
    %v932 = vsel %vm772, %v931, %v930
    %v933 = vrot.slane %v735, 6
    %v934 = vsel %vm775, %v933, %v932
    %v935 = vrot.slane %v740, 5
    %v936 = vsel %vm778, %v935, %v934
    %939 = vst.msk [vmem:[#allocation2 + $0x8] sm:$0xff] %vm109, %v922
    %940 = vst.msk [vmem:[#allocation2 + $0x18] sm:$0xff] %vm109, %v936
    %v941 = vrot.slane %v665, 5
    %v942 = vrot.slane %v670, 4
    %v943 = vsel %vm760, %v942, %v941
    %v944 = vrot.slane %v675, 3
    %v945 = vsel %vm763, %v944, %v943
    %v946 = vrot.slane %v680, 2
    %v947 = vsel %vm766, %v946, %v945
    %v948 = vrot.slane %v685, 1
    %v949 = vsel %vm769, %v948, %v947
    %v950 = vsel %vm772, %v690, %v949
    %v951 = vrot.slane %v695, 7
    %v952 = vsel %vm775, %v951, %v950
    %v953 = vrot.slane %v700, 6
    %v954 = vsel %vm778, %v953, %v952
    %v955 = vrot.slane %v705, 5
    %v956 = vrot.slane %v710, 4
    %v957 = vsel %vm760, %v956, %v955
    %v958 = vrot.slane %v715, 3
    %v959 = vsel %vm763, %v958, %v957
    %v960 = vrot.slane %v720, 2
    %v961 = vsel %vm766, %v960, %v959
    %v962 = vrot.slane %v725, 1
    %v963 = vsel %vm769, %v962, %v961
    %v964 = vsel %vm772, %v730, %v963
    %v965 = vrot.slane %v735, 7
    %v966 = vsel %vm775, %v965, %v964
    %v967 = vrot.slane %v740, 6
    %v968 = vsel %vm778, %v967, %v966
    %969 = vrot.lane.b32.xlu0 %v954, 32
    %v970 = vpop.permute.xlu0 %969
    %971 = vrot.lane.b32.xlu0 %v968, 32
    %v972 = vpop.permute.xlu0 %971
    %975 = vst.msk [vmem:[#allocation2 + $0x8] sm:$0xff] %vm832, %v970
    %976 = vst.msk [vmem:[#allocation2 + $0x18] sm:$0xff] %vm832, %v972
    %v977 = vrot.slane %v665, 6
    %v978 = vrot.slane %v670, 5
    %v979 = vsel %vm760, %v978, %v977
    %v980 = vrot.slane %v675, 4
    %v981 = vsel %vm763, %v980, %v979
    %v982 = vrot.slane %v680, 3
    %v983 = vsel %vm766, %v982, %v981
    %v984 = vrot.slane %v685, 2
    %v985 = vsel %vm769, %v984, %v983
    %v986 = vrot.slane %v690, 1
    %v987 = vsel %vm772, %v986, %v985
    %v988 = vsel %vm775, %v695, %v987
    %v989 = vrot.slane %v700, 7
    %v990 = vsel %vm778, %v989, %v988
    %v991 = vrot.slane %v705, 6
    %v992 = vrot.slane %v710, 5
    %v993 = vsel %vm760, %v992, %v991
    %v994 = vrot.slane %v715, 4
    %v995 = vsel %vm763, %v994, %v993
    %v996 = vrot.slane %v720, 3
    %v997 = vsel %vm766, %v996, %v995
    %v998 = vrot.slane %v725, 2
    %v999 = vsel %vm769, %v998, %v997
    %v1000 = vrot.slane %v730, 1
    %v1001 = vsel %vm772, %v1000, %v999
    %v1002 = vsel %vm775, %v735, %v1001
    %v1003 = vrot.slane %v740, 7
    %v1004 = vsel %vm778, %v1003, %v1002
    %1005 = vrot.lane.b32.xlu0 %v990, 64
    %v1006 = vpop.permute.xlu0 %1005
    %1007 = vrot.lane.b32.xlu0 %v1004, 64
    %v1008 = vpop.permute.xlu0 %1007
    %1011 = vst.msk [vmem:[#allocation2 + $0x8] sm:$0xff] %vm869, %v1006
    %1012 = vst.msk [vmem:[#allocation2 + $0x18] sm:$0xff] %vm869, %v1008
    %v1013 = vrot.slane %v665, 7
    %v1014 = vrot.slane %v670, 6
    %v1015 = vsel %vm760, %v1014, %v1013
    %v1016 = vrot.slane %v675, 5
    %v1017 = vsel %vm763, %v1016, %v1015
    %v1018 = vrot.slane %v680, 4
    %v1019 = vsel %vm766, %v1018, %v1017
    %v1020 = vrot.slane %v685, 3
    %v1021 = vsel %vm769, %v1020, %v1019
    %v1022 = vrot.slane %v690, 2
    %v1023 = vsel %vm772, %v1022, %v1021
    %v1024 = vrot.slane %v695, 1
    %v1025 = vsel %vm775, %v1024, %v1023
    %v1026 = vsel %vm778, %v700, %v1025
    %v1027 = vrot.slane %v705, 7
    %v1028 = vrot.slane %v710, 6
    %v1029 = vsel %vm760, %v1028, %v1027
    %v1030 = vrot.slane %v715, 5
    %v1031 = vsel %vm763, %v1030, %v1029
    %v1032 = vrot.slane %v720, 4
    %v1033 = vsel %vm766, %v1032, %v1031
    %v1034 = vrot.slane %v725, 3
    %v1035 = vsel %vm769, %v1034, %v1033
    %v1036 = vrot.slane %v730, 2
    %v1037 = vsel %vm772, %v1036, %v1035
    %v1038 = vrot.slane %v735, 1
    %v1039 = vsel %vm775, %v1038, %v1037
    %v1040 = vsel %vm778, %v740, %v1039
    %1041 = vrot.lane.b32.xlu0 %v1026, 96
    %v1042 = vpop.permute.xlu0 %1041
    %1043 = vrot.lane.b32.xlu0 %v1040, 96
    %v1044 = vpop.permute.xlu0 %1043
    %1047 = vst.msk [vmem:[#allocation2 + $0x8] sm:$0xff] %vm906, %v1042
    %1048 = vst.msk [vmem:[#allocation2 + $0x18] sm:$0xff] %vm906, %v1044
    %v1049 = vld [vmem:[#allocation2] sm:$0xff]
    %v1050 = vld [vmem:[#allocation2 + $0x8] sm:$0xff]
    %v1051 = vld [vmem:[#allocation2 + $0x10] sm:$0xff]
    %v1052 = vld [vmem:[#allocation2 + $0x18] sm:$0xff]
    %v1053 = vmul.f32 %v1049, 2.0
    %v1054 = vmul.f32 %v1050, 2.0
    %v1055 = vmul.f32 %v1051, 2.0
    %v1056 = vmul.f32 %v1052, 2.0
    %v1057 = vtanh.pop %v1053
    %v1058 = vtanh.pop %v1054
    %v1059 = vtanh.pop %v1055
    %v1060 = vtanh.pop %v1056
    %1061 = vrot.lane.b32.xlu0 %v1049, 32
    %v1062 = vpop.permute.xlu0 %1061
    %1063 = vrot.lane.b32.xlu0 %v1051, 32
    %v1064 = vpop.permute.xlu0 %1063
    %1065 = vrot.lane.b32.xlu0 %v1050, 32
    %v1066 = vpop.permute.xlu0 %1065
    %1067 = vrot.lane.b32.xlu0 %v1052, 32
    %v1068 = vpop.permute.xlu0 %1067
    %v1069 = vlaneseq
    %v1070 = vand.u32 %v1069, 127
    %vm1071 = vcmp.lt.s32.totalorder %v1070, 32
    %v1072 = vsel %vm1071, %v1062, %v1066
    %v1073 = vsel %vm1071, %v1064, %v1068
    %v1074 = vsel %vm1071, %v1066, %v1062
    %v1075 = vsel %vm1071, %v1068, %v1064
    %v1076 = vadd.f32 %v1049, %v1074
    %v1077 = vadd.f32 %v1050, %v1072
    %v1078 = vadd.f32 %v1051, %v1075
    %v1079 = vadd.f32 %v1052, %v1073
    %v1080 = vtanh.pop %v1076
    %v1081 = vtanh.pop %v1077
    %v1082 = vtanh.pop %v1078
    %v1083 = vtanh.pop %v1079
    %v1084 = vmul.f32 %v1080, 2.0
    %v1085 = vmul.f32 %v1081, 2.0
    %v1086 = vmul.f32 %v1082, 2.0
    %v1087 = vmul.f32 %v1083, 2.0
    %v1088 = vadd.f32 %v1057, %v1084
    %v1089 = vadd.f32 %v1058, %v1085
    %v1090 = vadd.f32 %v1059, %v1086
    %v1091 = vadd.f32 %v1060, %v1087
    %1092 = vrot.lane.b32.xlu0 %v1049, 64
    %v1093 = vpop.permute.xlu0 %1092
    %1094 = vrot.lane.b32.xlu0 %v1051, 64
    %v1095 = vpop.permute.xlu0 %1094
    %1096 = vrot.lane.b32.xlu0 %v1050, 64
    %v1097 = vpop.permute.xlu0 %1096
    %1098 = vrot.lane.b32.xlu0 %v1052, 64
    %v1099 = vpop.permute.xlu0 %1098
    %vm1100 = vcmp.lt.s32.totalorder %v1070, 64
    %v1101 = vsel %vm1100, %v1093, %v1097
    %v1102 = vsel %vm1100, %v1095, %v1099
    %v1103 = vsel %vm1100, %v1097, %v1093
    %v1104 = vsel %vm1100, %v1099, %v1095
    %v1105 = vadd.f32 %v1049, %v1103
    %v1106 = vadd.f32 %v1050, %v1101
    %v1107 = vadd.f32 %v1051, %v1104
    %v1108 = vadd.f32 %v1052, %v1102
    %v1109 = vtanh.pop %v1105
    %v1110 = vtanh.pop %v1106
    %v1111 = vtanh.pop %v1107
    %v1112 = vtanh.pop %v1108
    %v1113 = vmul.f32 %v1109, 2.0
    %v1114 = vmul.f32 %v1110, 2.0
    %v1115 = vmul.f32 %v1111, 2.0
    %v1116 = vmul.f32 %v1112, 2.0
    %v1117 = vadd.f32 %v1088, %v1113
    %v1118 = vadd.f32 %v1089, %v1114
    %v1119 = vadd.f32 %v1090, %v1115
    %v1120 = vadd.f32 %v1091, %v1116
    %1121 = vrot.lane.b32.xlu0 %v1049, 96
    %v1122 = vpop.permute.xlu0 %1121
    %1123 = vrot.lane.b32.xlu0 %v1051, 96
    %v1124 = vpop.permute.xlu0 %1123
    %1125 = vrot.lane.b32.xlu0 %v1050, 96
    %v1126 = vpop.permute.xlu0 %1125
    %1127 = vrot.lane.b32.xlu0 %v1052, 96
    %v1128 = vpop.permute.xlu0 %1127
    %vm1129 = vcmp.lt.s32.totalorder %v1070, 96
    %v1130 = vsel %vm1129, %v1122, %v1126
    %v1131 = vsel %vm1129, %v1124, %v1128
    %v1132 = vsel %vm1129, %v1126, %v1122
    %v1133 = vsel %vm1129, %v1128, %v1124
    %v1134 = vadd.f32 %v1049, %v1132
    %v1135 = vadd.f32 %v1050, %v1130
    %v1136 = vadd.f32 %v1051, %v1133
    %v1137 = vadd.f32 %v1052, %v1131
    %v1138 = vtanh.pop %v1134
    %v1139 = vtanh.pop %v1135
    %v1140 = vtanh.pop %v1136
    %v1141 = vtanh.pop %v1137
    %v1142 = vmul.f32 %v1138, 2.0
    %v1143 = vmul.f32 %v1139, 2.0
    %v1144 = vmul.f32 %v1140, 2.0
    %v1145 = vmul.f32 %v1141, 2.0
    %v1146 = vadd.f32 %v1117, %v1142
    %v1147 = vadd.f32 %v1118, %v1143
    %v1148 = vadd.f32 %v1119, %v1144
    %v1149 = vadd.f32 %v1120, %v1145
    %v1150 = vadd.f32 %v1049, %v1050
    %v1151 = vadd.f32 %v1051, %v1052
    %v1152 = vtanh.pop %v1150
    %v1153 = vtanh.pop %v1151
    %v1154 = vadd.f32 %v1146, %v1152
    %v1155 = vadd.f32 %v1147, %v1152
    %v1156 = vadd.f32 %v1148, %v1153
    %v1157 = vadd.f32 %v1149, %v1153
    %1160 = vrot.lane.b32.xlu0 %v1154, 96
    %v1161 = vpop.permute.xlu0 %1160
    %1162 = vrot.lane.b32.xlu0 %v1156, 96
    %v1163 = vpop.permute.xlu0 %1162
    %v1166 = vadd.f32 %v1154, %v1161
    %v1167 = vadd.f32 %v1156, %v1163
    %1168 = vrot.lane.b32.xlu0 %v1154, 64
    %v1169 = vpop.permute.xlu0 %1168
    %1170 = vrot.lane.b32.xlu0 %v1156, 64
    %v1171 = vpop.permute.xlu0 %1170
    %v1174 = vadd.f32 %v1166, %v1169
    %v1175 = vadd.f32 %v1167, %v1171
    %1176 = vrot.lane.b32.xlu0 %v1154, 32
    %v1177 = vpop.permute.xlu0 %1176
    %1178 = vrot.lane.b32.xlu0 %v1156, 32
    %v1179 = vpop.permute.xlu0 %1178
    %v1182 = vadd.f32 %v1174, %v1177
    %v1183 = vadd.f32 %v1175, %v1179
    %v1184 = vadd.f32 %v1182, %v1155
    %v1185 = vadd.f32 %v1183, %v1157
    %1188 = vrot.lane.b32.xlu0 %v1155, 96
    %v1189 = vpop.permute.xlu0 %1188
    %1190 = vrot.lane.b32.xlu0 %v1157, 96
    %v1191 = vpop.permute.xlu0 %1190
    %v1194 = vadd.f32 %v1184, %v1189
    %v1195 = vadd.f32 %v1185, %v1191
    %1196 = vrot.lane.b32.xlu0 %v1155, 64
    %v1197 = vpop.permute.xlu0 %1196
    %1198 = vrot.lane.b32.xlu0 %v1157, 64
    %v1199 = vpop.permute.xlu0 %1198
    %v1202 = vadd.f32 %v1194, %v1197
    %v1203 = vadd.f32 %v1195, %v1199
    %1204 = vrot.lane.b32.xlu0 %v1155, 32
    %v1205 = vpop.permute.xlu0 %1204
    %1206 = vrot.lane.b32.xlu0 %v1157, 32
    %v1207 = vpop.permute.xlu0 %1206
    %v1210 = vadd.f32 %v1202, %v1205
    %v1211 = vadd.f32 %v1203, %v1207
    %v1212 = vmul.f32 %v1210, 0.015625
    %v1213 = vmul.f32 %v1211, 0.015625
    %1214 = vst.msk [vmem:[#allocation11] sm:$0xff] %vm109, %v1212
    %1215 = vst.msk [vmem:[#allocation11 + $0x8] sm:$0xff] %vm109, %v1213
    // Predicated region
    $region46: #{tpu_custom_call.1} parent=1 // pred_check
      _
    $region47: #{tpu_custom_call.1} parent=1 // pred_check_branch
      %1217 = sbr.rel (0) target = $region49
    $region48: #{tpu_custom_call.1} parent=1 // pred_region
      %s1219 = ssub.s32 256, 256
      %1220 = vsyncadd [#allocation5], %s1219
      %s1221 = sshll.u32 [#allocation11], 4
      %s1222 = int_to_ptr.vmem [resolvable:$true] %s1221
      %1227 = dma.vmem_to_hbm [thread:$0]  %s1222, 256, %s7, [#allocation5], 128, 128, 8
    $region49: #{tpu_custom_call.1} parent=1 // pred_fallthru
      _
    // Predicated region
    $region50: #{tpu_custom_call.1} parent=1 // pred_check
      _
    $region51: #{tpu_custom_call.1} parent=1 // pred_check_branch
      %1229 = sbr.rel (0) target = $region53
    $region52: #{tpu_custom_call.1} parent=1 // pred_region
      %1230 = dma.done [#allocation5], 256
    $region53: #{tpu_custom_call.1} parent=1 // pred_fallthru
      _
    %1231 = vsyncpa [#allocation4], 1
    %1232 = vsyncpa [#allocation7], 1
    %1233 = vsyncpa [#allocation10], 1
    %1234 = vsyncpa [#allocation5], 1

</llo_original>
